<compile_context>
chip_gen: v6e
topology: v6e:2x2x1
jax: 0.10.0
libtpu: 0.0.40
codegen_flags: <defaults>
</compile_context>

<pallas_src>
import functools

import jax
import jax.numpy as jnp
from jax.experimental import pallas as pl
from jax.experimental.pallas import tpu as pltpu

_R, _G, _B = 0.2989, 0.587, 0.114
_CANNY_HI_SQ = 150.0 * 150.0            # compare squared magnitude (no sqrt)

_VMEM_LIMIT_BYTES = 48 * 1024 * 1024    # safe on v5e/v6e (128 MiB) and v7x (64 MiB/TC)
_TH_VMEM_BUDGET = 32 * 1024 * 1024      # headroom below the limit for tile selection


def _bfa_kernel(x_ref, halo_ref, w_ref, b_ref, o_ref, *, C, Co, TH, W):
    # x_ref   : (1, C, TH, W)   input tile (rows -> sublanes, cols -> lanes), any dtype
    # halo_ref: (1, 1, 2, W)    f32 grayscale of row above / row below (0 outside image)
    # w_ref   : (Co, C+1)       SMEM f32: 1x1 conv weight over [x ; edge] channels
    # b_ref   : (Co,)           SMEM f32: bias
    # o_ref   : (1, Co, TH, W)  output tile
    f32 = jnp.float32

    # Load each input channel once; reused by grayscale and by the 1x1 conv.
    xc = [x_ref[0, c].astype(f32) for c in range(C)]                     # C x (TH, W)

    # ---------------- grayscale (ITU-R 601) + ~uint8 quantization ----------------
    # Saturating cast model of the numpy uint8 cast (see correctness notes).
    quant = lambda v: jnp.clip(jnp.floor(v), 0.0, 255.0)
    g_mid = quant(_R * xc[0] + _G * xc[1] + _B * xc[2])                  # (TH, W)
    g_top = quant(halo_ref[0, 0, 0:1, :])                                # (1, W)
    g_bot = quant(halo_ref[0, 0, 1:2, :])                                # (1, W)

    # Row bands aligned with the tile rows: top[r] = gray[r-1], bot[r] = gray[r+1].
    top = jnp.concatenate([g_top, g_mid[:TH - 1, :]], axis=0)            # (TH, W)
    bot = jnp.concatenate([g_mid[1:, :], g_bot], axis=0)                 # (TH, W)
    mid = g_mid

    # ---------------- Sobel via lane rolls (XLU) + zero-boundary selects ---------
    cols = jax.lax.broadcasted_iota(jnp.int32, (TH, W), 1)
    left_edge = cols == 0
    right_edge = cols == (W - 1)

    def shl(a):     # neighbour value at x+1 (zero beyond right image border)
        return jnp.where(right_edge, 0.0, pltpu.roll(a, shift=W - 1, axis=1))

    def shr(a):     # neighbour value at x-1 (zero beyond left image border)
        return jnp.where(left_edge, 0.0, pltpu.roll(a, shift=1, axis=1))

    # Factored Sobel: only 4 rolls / 4 selects instead of 8 neighbour reads.
    #   gx = L(top + 2*mid + bot) - R(top + 2*mid + bot)
    #   gy = R(bot - top) + 2*(bot - top) + L(bot - top)
    col_sum = top + 2.0 * mid + bot
    gx = shl(col_sum) - shr(col_sum)
    d = bot - top
    gy = shr(d) + 2.0 * d + shl(d)

    # TODO(synk): cv2.Canny (Gaussian blur, non-max suppression, hysteresis) has no
    # clean Pallas equivalent; approximated by a Sobel gradient-magnitude threshold
    # at the Canny high threshold (150), same 0/255 encoding.
    edge = jnp.where(gx * gx + gy * gy >= _CANNY_HI_SQ, 255.0, 0.0)      # (TH, W)

    # ---------------- 1x1 conv + ReLU on the VPU (MXU not worth K=C+1) ----------
    for o in range(Co):
        acc = xc[0] * w_ref[o, 0]
        for c in range(1, C):
            acc = acc + xc[c] * w_ref[o, c]
        acc = acc + edge * w_ref[o, C]
        o_ref[0, o] = jnp.maximum(acc + b_ref[o], 0.0).astype(o_ref.dtype)


def _pick_tile_h(H, W, C, Co, in_bytes, out_bytes, budget_bytes=_TH_VMEM_BUDGET):
    """Largest row tile TH (multiple of 8, dividing H) within the VMEM budget."""
    def per_step_bytes(th):
        return (2 * C * th * W * in_bytes          # double-buffered input tile
                + 2 * Co * th * W * out_bytes      # double-buffered output tile
                + 2 * 2 * W * 4                    # halo rows
                + 12 * th * W * 4)                 # f32 temporaries / spill headroom
    cands = [th for th in range(8, H + 1, 8)
             if H % th == 0 and per_step_bytes(th) <= budget_bytes]
    if cands:
        return max(cands)
    # Fallback: whole image as one row tile (block == full dims is always legal).
    return H


def bfa_forward(x, w, b, *, tile_h=None, out_dtype=None):
    """x: (N,C,H,W) (C>=3); w: (Co,C+1[,1,1]); b: (Co,) -> (N,Co,H,W)."""
    N, C, H, W = x.shape
    Co = w.shape[0]
    assert C >= 3
    if out_dtype is None:
        out_dtype = x.dtype if jnp.issubdtype(x.dtype, jnp.floating) else jnp.float32

    in_bytes = jnp.dtype(x.dtype).itemsize
    out_bytes = jnp.dtype(out_dtype).itemsize
    TH = _pick_tile_h(H, W, C, Co, in_bytes, out_bytes) if tile_h is None else tile_h
    assert H % TH == 0
    assert TH == H or TH % 8 == 0
    T = H // TH

    w2 = jnp.asarray(w).reshape(Co, C + 1).astype(jnp.float32)
    b1 = jnp.asarray(b).reshape(Co).astype(jnp.float32)

    # Per-tile halo: grayscale of the row above / below each tile, zero outside the
    # image (matches zero padding of the gray image). Shape (N, T, 2, W).
    def gray_rows(rows):                     # rows: (N, 3, K, W) -> (N, K, W) f32
        r = rows.astype(jnp.float32)
        return _R * r[:, 0] + _G * r[:, 1] + _B * r[:, 2]

    zeros1 = jnp.zeros((N, 1, W), jnp.float32)
    if T > 1:
        above = jnp.concatenate(
            [zeros1, gray_rows(x[:, :3, TH - 1:H - 1:TH, :])], axis=1)   # (N, T, W)
        below = jnp.concatenate(
            [gray_rows(x[:, :3, TH:H:TH, :]), zeros1], axis=1)           # (N, T, W)
    else:
        above, below = zeros1, zeros1
    halo = jnp.stack([above, below], axis=2)                             # (N, T, 2, W)

    kernel = functools.partial(_bfa_kernel, C=C, Co=Co, TH=TH, W=W)

    out = pl.pallas_call(
        kernel,
        out_shape=jax.ShapeDtypeStruct((N, Co, H, W), out_dtype),
        grid_spec=pltpu.PrefetchScalarGridSpec(
            num_scalar_prefetch=0,
            grid=(N, T),
            in_specs=[
                pl.BlockSpec((1, C, TH, W), lambda n, t: (n, 0, t, 0)),
                pl.BlockSpec((1, 1, 2, W), lambda n, t: (n, t, 0, 0)),
                pl.BlockSpec(memory_space=pltpu.MemorySpace.SMEM),   # weights (scalars)
                pl.BlockSpec(memory_space=pltpu.MemorySpace.SMEM),   # bias (scalars)
            ],
            out_specs=pl.BlockSpec((1, Co, TH, W), lambda n, t: (n, 0, t, 0)),
        ),
        compiler_params=pltpu.CompilerParams(
            dimension_semantics=("parallel", "parallel"),
            vmem_limit_bytes=_VMEM_LIMIT_BYTES,
        ),
    )(x, halo, w2, b1)
    return out


def bfa_reference(x, w, b):
    """Pure-JAX reference with identical (Canny-approximated) math."""
    N, C, H, W = x.shape
    Co = w.shape[0]
    xf = x.astype(jnp.float32)
    gray = _R * xf[:, 0] + _G * xf[:, 1] + _B * xf[:, 2]                 # (N,H,W)
    g = jnp.clip(jnp.floor(gray), 0.0, 255.0)
    gp = jnp.pad(g, ((0, 0), (1, 1), (1, 1)))

    def nb(dy, dx):
        return gp[:, 1 + dy:1 + dy + H, 1 + dx:1 + dx + W]

    gx = ((nb(-1, 1) + 2.0 * nb(0, 1) + nb(1, 1))
          - (nb(-1, -1) + 2.0 * nb(0, -1) + nb(1, -1)))
    gy = ((nb(1, -1) + 2.0 * nb(1, 0) + nb(1, 1))
          - (nb(-1, -1) + 2.0 * nb(-1, 0) + nb(-1, 1)))
    edge = jnp.where(gx * gx + gy * gy >= _CANNY_HI_SQ, 255.0, 0.0)[:, None]
    cat = jnp.concatenate([xf, edge], axis=1)                            # (N,C+1,H,W)
    out = jnp.einsum('oc,nchw->nohw', jnp.asarray(w).reshape(Co, C + 1).astype(jnp.float32), cat)
    out = out + jnp.asarray(b).reshape(Co)[None, :, None, None]
    return jnp.maximum(out, 0.0)


if __name__ == "__main__":
    N, C, H, W, Co = 2, 4, 16, 16, 8

    key = jax.random.PRNGKey(0)
    kx, kw, kb = jax.random.split(key, 3)

    # image-like inputs in [0, 255] so the edge detector is exercised
    x = jax.random.uniform(kx, (N, C, H, W), jnp.float32, 0.0, 255.0)

    # Conv2d(in_channels+1, out_channels, 1) params (PyTorch-style uniform init)
    fan_in = C + 1
    bound = (1.0 / fan_in) ** 0.5
    w = jax.random.uniform(kw, (Co, C + 1, 1, 1), jnp.float32, -bound, bound)
    b = jax.random.uniform(kb, (Co,), jnp.float32, -bound, bound)

    ref = bfa_reference(x, w, b)

    # default tiling (single row tile per image) and explicit 2-tile path
    # (exercises the halo + parallel row-tiling code path).
    for th in (None, 8):
        out = jax.block_until_ready(bfa_forward(x, w, b, tile_h=th))
        assert out.shape == (N, Co, H, W), out.shape
        assert jnp.allclose(out, ref, rtol=1e-3, atol=1e-1), \
            float(jnp.max(jnp.abs(out - ref)))

    print("KERNEL_OK")
</pallas_src>

<mosaic_0001>
module attributes {stable_mosaic.version = 11 : i64} {
  func.func @_bfa_kernel(%arg0: i32, %arg1: i32, %arg2: memref<1x4x16x16xf32, #tpu.memory_space<vmem>>, %arg3: memref<1x1x2x16xf32, #tpu.memory_space<vmem>>, %arg4: memref<8x5xf32, #tpu.memory_space<smem>>, %arg5: memref<8xf32, #tpu.memory_space<smem>>, %arg6: memref<1x8x16x16xf32, #tpu.memory_space<vmem>>) attributes {dimension_semantics = [#tpu.dimension_semantics<parallel>, #tpu.dimension_semantics<parallel>], iteration_bounds = array<i64: 2, 1>, scalar_prefetch = 0 : i64, scratch_operands = 0 : i64, tpu.core_type = #tpu.core_type<tc>, window_params = [{transform_indices = @transform_0, window_bounds = array<i64: 1, 4, 16, 16>}, {transform_indices = @transform_1, window_bounds = array<i64: 1, 1, 2, 16>}, {transform_indices = @transform_2, window_bounds = array<i64: 8, 5>}, {transform_indices = @transform_3, window_bounds = array<i64: 8>}, {transform_indices = @transform_4, window_bounds = array<i64: 1, 8, 16, 16>}]} {
    %c0 = arith.constant 0 : index
    %c0_0 = arith.constant 0 : index
    %c0_1 = arith.constant 0 : index
    %c0_2 = arith.constant 0 : index
    %0 = vector.load %arg2[%c0, %c0_0, %c0_1, %c0_2] : memref<1x4x16x16xf32, #tpu.memory_space<vmem>>, vector<1x1x16x16xf32>
    %1 = vector.shape_cast %0 : vector<1x1x16x16xf32> to vector<16x16xf32>
    %c0_3 = arith.constant 0 : index
    %c1 = arith.constant 1 : index
    %c0_4 = arith.constant 0 : index
    %c0_5 = arith.constant 0 : index
    %2 = vector.load %arg2[%c0_3, %c1, %c0_4, %c0_5] : memref<1x4x16x16xf32, #tpu.memory_space<vmem>>, vector<1x1x16x16xf32>
    %3 = vector.shape_cast %2 : vector<1x1x16x16xf32> to vector<16x16xf32>
    %c0_6 = arith.constant 0 : index
    %c2 = arith.constant 2 : index
    %c0_7 = arith.constant 0 : index
    %c0_8 = arith.constant 0 : index
    %4 = vector.load %arg2[%c0_6, %c2, %c0_7, %c0_8] : memref<1x4x16x16xf32, #tpu.memory_space<vmem>>, vector<1x1x16x16xf32>
    %5 = vector.shape_cast %4 : vector<1x1x16x16xf32> to vector<16x16xf32>
    %c0_9 = arith.constant 0 : index
    %c3 = arith.constant 3 : index
    %c0_10 = arith.constant 0 : index
    %c0_11 = arith.constant 0 : index
    %6 = vector.load %arg2[%c0_9, %c3, %c0_10, %c0_11] : memref<1x4x16x16xf32, #tpu.memory_space<vmem>>, vector<1x1x16x16xf32>
    %7 = vector.shape_cast %6 : vector<1x1x16x16xf32> to vector<16x16xf32>
    %cst = arith.constant 2.989000e-01 : f32
    %8 = vector.broadcast %cst : f32 to vector<16x16xf32>
    %9 = arith.mulf %8, %1 : vector<16x16xf32>
    %cst_12 = arith.constant 5.870000e-01 : f32
    %10 = vector.broadcast %cst_12 : f32 to vector<16x16xf32>
    %11 = arith.mulf %10, %3 : vector<16x16xf32>
    %12 = arith.addf %9, %11 : vector<16x16xf32>
    %cst_13 = arith.constant 1.140000e-01 : f32
    %13 = vector.broadcast %cst_13 : f32 to vector<16x16xf32>
    %14 = arith.mulf %13, %5 : vector<16x16xf32>
    %15 = arith.addf %12, %14 : vector<16x16xf32>
    %16 = math.floor %15 : vector<16x16xf32>
    %cst_14 = arith.constant 0.000000e+00 : f32
    %cst_15 = arith.constant 2.550000e+02 : f32
    %17 = vector.broadcast %cst_14 : f32 to vector<16x16xf32>
    %18 = arith.maximumf %17, %16 : vector<16x16xf32>
    %19 = vector.broadcast %cst_15 : f32 to vector<16x16xf32>
    %20 = arith.minimumf %19, %18 : vector<16x16xf32>
    %c0_16 = arith.constant 0 : index
    %c0_17 = arith.constant 0 : index
    %c0_18 = arith.constant 0 : index
    %c0_19 = arith.constant 0 : index
    %21 = vector.load %arg3[%c0_16, %c0_17, %c0_18, %c0_19] : memref<1x1x2x16xf32, #tpu.memory_space<vmem>>, vector<1x1x1x16xf32>
    %22 = vector.shape_cast %21 : vector<1x1x1x16xf32> to vector<1x16xf32>
    %23 = math.floor %22 : vector<1x16xf32>
    %cst_20 = arith.constant 0.000000e+00 : f32
    %cst_21 = arith.constant 2.550000e+02 : f32
    %24 = vector.broadcast %cst_20 : f32 to vector<1x16xf32>
    %25 = arith.maximumf %24, %23 : vector<1x16xf32>
    %26 = vector.broadcast %cst_21 : f32 to vector<1x16xf32>
    %27 = arith.minimumf %26, %25 : vector<1x16xf32>
    %c0_22 = arith.constant 0 : index
    %c0_23 = arith.constant 0 : index
    %c1_24 = arith.constant 1 : index
    %c0_25 = arith.constant 0 : index
    %28 = vector.load %arg3[%c0_22, %c0_23, %c1_24, %c0_25] : memref<1x1x2x16xf32, #tpu.memory_space<vmem>>, vector<1x1x1x16xf32>
    %29 = vector.shape_cast %28 : vector<1x1x1x16xf32> to vector<1x16xf32>
    %30 = math.floor %29 : vector<1x16xf32>
    %cst_26 = arith.constant 0.000000e+00 : f32
    %cst_27 = arith.constant 2.550000e+02 : f32
    %31 = vector.broadcast %cst_26 : f32 to vector<1x16xf32>
    %32 = arith.maximumf %31, %30 : vector<1x16xf32>
    %33 = vector.broadcast %cst_27 : f32 to vector<1x16xf32>
    %34 = arith.minimumf %33, %32 : vector<1x16xf32>
    %35 = vector.extract_strided_slice %20 {offsets = [0, 0], sizes = [15, 16], strides = [1, 1]} : vector<16x16xf32> to vector<15x16xf32>
    %36 = tpu.concatenate %27, %35 in 0 : vector<1x16xf32>, vector<15x16xf32> -> vector<16x16xf32>
    %37 = vector.extract_strided_slice %20 {offsets = [1, 0], sizes = [15, 16], strides = [1, 1]} : vector<16x16xf32> to vector<15x16xf32>
    %38 = tpu.concatenate %37, %34 in 0 : vector<15x16xf32>, vector<1x16xf32> -> vector<16x16xf32>
    %39 = tpu.iota {dimensions = array<i32: 1>} : vector<16x16xi32>
    %c0_i32 = arith.constant 0 : i32
    %40 = vector.broadcast %c0_i32 : i32 to vector<16x16xi32>
    %41 = arith.cmpi eq, %39, %40 : vector<16x16xi32>
    %c15_i32 = arith.constant 15 : i32
    %42 = vector.broadcast %c15_i32 : i32 to vector<16x16xi32>
    %43 = arith.cmpi eq, %39, %42 : vector<16x16xi32>
    %cst_28 = arith.constant 2.000000e+00 : f32
    %44 = vector.broadcast %cst_28 : f32 to vector<16x16xf32>
    %45 = arith.mulf %44, %20 : vector<16x16xf32>
    %46 = arith.addf %36, %45 : vector<16x16xf32>
    %47 = arith.addf %46, %38 : vector<16x16xf32>
    %c15_i32_29 = arith.constant 15 : i32
    %48 = tpu.dynamic_rotate %47 by %c15_i32_29 dim 1 : vector<16x16xf32>, i32 -> vector<16x16xf32>
    %cst_30 = arith.constant 0.000000e+00 : f32
    %49 = vector.broadcast %cst_30 : f32 to vector<16x16xf32>
    %50 = arith.select %43, %49, %48 : vector<16x16xi1>, vector<16x16xf32>
    %c1_i32 = arith.constant 1 : i32
    %51 = tpu.dynamic_rotate %47 by %c1_i32 dim 1 : vector<16x16xf32>, i32 -> vector<16x16xf32>
    %cst_31 = arith.constant 0.000000e+00 : f32
    %52 = vector.broadcast %cst_31 : f32 to vector<16x16xf32>
    %53 = arith.select %41, %52, %51 : vector<16x16xi1>, vector<16x16xf32>
    %54 = arith.subf %50, %53 : vector<16x16xf32>
    %55 = arith.subf %38, %36 : vector<16x16xf32>
    %c1_i32_32 = arith.constant 1 : i32
    %56 = tpu.dynamic_rotate %55 by %c1_i32_32 dim 1 : vector<16x16xf32>, i32 -> vector<16x16xf32>
    %cst_33 = arith.constant 0.000000e+00 : f32
    %57 = vector.broadcast %cst_33 : f32 to vector<16x16xf32>
    %58 = arith.select %41, %57, %56 : vector<16x16xi1>, vector<16x16xf32>
    %cst_34 = arith.constant 2.000000e+00 : f32
    %59 = vector.broadcast %cst_34 : f32 to vector<16x16xf32>
    %60 = arith.mulf %59, %55 : vector<16x16xf32>
    %61 = arith.addf %58, %60 : vector<16x16xf32>
    %c15_i32_35 = arith.constant 15 : i32
    %62 = tpu.dynamic_rotate %55 by %c15_i32_35 dim 1 : vector<16x16xf32>, i32 -> vector<16x16xf32>
    %cst_36 = arith.constant 0.000000e+00 : f32
    %63 = vector.broadcast %cst_36 : f32 to vector<16x16xf32>
    %64 = arith.select %43, %63, %62 : vector<16x16xi1>, vector<16x16xf32>
    %65 = arith.addf %61, %64 : vector<16x16xf32>
    %66 = arith.mulf %54, %54 : vector<16x16xf32>
    %67 = arith.mulf %65, %65 : vector<16x16xf32>
    %68 = arith.addf %66, %67 : vector<16x16xf32>
    %cst_37 = arith.constant 2.250000e+04 : f32
    %69 = vector.broadcast %cst_37 : f32 to vector<16x16xf32>
    %70 = arith.cmpf oge, %68, %69 : vector<16x16xf32>
    %cst_38 = arith.constant 2.550000e+02 : f32
    %cst_39 = arith.constant 0.000000e+00 : f32
    %71 = vector.broadcast %cst_38 : f32 to vector<16x16xf32>
    %72 = vector.broadcast %cst_39 : f32 to vector<16x16xf32>
    %73 = arith.select %70, %71, %72 : vector<16x16xi1>, vector<16x16xf32>
    %c0_40 = arith.constant 0 : index
    %c0_41 = arith.constant 0 : index
    %74 = memref.load %arg4[%c0_40, %c0_41] : memref<8x5xf32, #tpu.memory_space<smem>>
    %75 = vector.broadcast %74 : f32 to vector<16x16xf32>
    %76 = arith.mulf %1, %75 : vector<16x16xf32>
    %c0_42 = arith.constant 0 : index
    %c1_43 = arith.constant 1 : index
    %77 = memref.load %arg4[%c0_42, %c1_43] : memref<8x5xf32, #tpu.memory_space<smem>>
    %78 = vector.broadcast %77 : f32 to vector<16x16xf32>
    %79 = arith.mulf %3, %78 : vector<16x16xf32>
    %80 = arith.addf %76, %79 : vector<16x16xf32>
    %c0_44 = arith.constant 0 : index
    %c2_45 = arith.constant 2 : index
    %81 = memref.load %arg4[%c0_44, %c2_45] : memref<8x5xf32, #tpu.memory_space<smem>>
    %82 = vector.broadcast %81 : f32 to vector<16x16xf32>
    %83 = arith.mulf %5, %82 : vector<16x16xf32>
    %84 = arith.addf %80, %83 : vector<16x16xf32>
    %c0_46 = arith.constant 0 : index
    %c3_47 = arith.constant 3 : index
    %85 = memref.load %arg4[%c0_46, %c3_47] : memref<8x5xf32, #tpu.memory_space<smem>>
    %86 = vector.broadcast %85 : f32 to vector<16x16xf32>
    %87 = arith.mulf %7, %86 : vector<16x16xf32>
    %88 = arith.addf %84, %87 : vector<16x16xf32>
    %c0_48 = arith.constant 0 : index
    %c4 = arith.constant 4 : index
    %89 = memref.load %arg4[%c0_48, %c4] : memref<8x5xf32, #tpu.memory_space<smem>>
    %90 = vector.broadcast %89 : f32 to vector<16x16xf32>
    %91 = arith.mulf %73, %90 : vector<16x16xf32>
    %92 = arith.addf %88, %91 : vector<16x16xf32>
    %c0_49 = arith.constant 0 : index
    %93 = memref.load %arg5[%c0_49] : memref<8xf32, #tpu.memory_space<smem>>
    %94 = vector.broadcast %93 : f32 to vector<16x16xf32>
    %95 = arith.addf %92, %94 : vector<16x16xf32>
    %cst_50 = arith.constant 0.000000e+00 : f32
    %96 = vector.broadcast %cst_50 : f32 to vector<16x16xf32>
    %97 = arith.maximumf %95, %96 : vector<16x16xf32>
    %c0_51 = arith.constant 0 : index
    %c0_52 = arith.constant 0 : index
    %c0_53 = arith.constant 0 : index
    %c0_54 = arith.constant 0 : index
    %98 = vector.load %arg6[%c0_51, %c0_52, %c0_53, %c0_54] : memref<1x8x16x16xf32, #tpu.memory_space<vmem>>, vector<1x1x16x16xf32>
    %99 = vector.shape_cast %98 : vector<1x1x16x16xf32> to vector<16x16xf32>
    %100 = vector.shape_cast %97 : vector<16x16xf32> to vector<1x1x16x16xf32>
    tpu.vector_store %arg6[%c0_51, %c0_52, %c0_53, %c0_54], %100 {strides = array<i32>} : memref<1x8x16x16xf32, #tpu.memory_space<vmem>>, vector<1x1x16x16xf32>,
    %c1_55 = arith.constant 1 : index
    %c0_56 = arith.constant 0 : index
    %101 = memref.load %arg4[%c1_55, %c0_56] : memref<8x5xf32, #tpu.memory_space<smem>>
    %102 = vector.broadcast %101 : f32 to vector<16x16xf32>
    %103 = arith.mulf %1, %102 : vector<16x16xf32>
    %c1_57 = arith.constant 1 : index
    %c1_58 = arith.constant 1 : index
    %104 = memref.load %arg4[%c1_57, %c1_58] : memref<8x5xf32, #tpu.memory_space<smem>>
    %105 = vector.broadcast %104 : f32 to vector<16x16xf32>
    %106 = arith.mulf %3, %105 : vector<16x16xf32>
    %107 = arith.addf %103, %106 : vector<16x16xf32>
    %c1_59 = arith.constant 1 : index
    %c2_60 = arith.constant 2 : index
    %108 = memref.load %arg4[%c1_59, %c2_60] : memref<8x5xf32, #tpu.memory_space<smem>>
    %109 = vector.broadcast %108 : f32 to vector<16x16xf32>
    %110 = arith.mulf %5, %109 : vector<16x16xf32>
    %111 = arith.addf %107, %110 : vector<16x16xf32>
    %c1_61 = arith.constant 1 : index
    %c3_62 = arith.constant 3 : index
    %112 = memref.load %arg4[%c1_61, %c3_62] : memref<8x5xf32, #tpu.memory_space<smem>>
    %113 = vector.broadcast %112 : f32 to vector<16x16xf32>
    %114 = arith.mulf %7, %113 : vector<16x16xf32>
    %115 = arith.addf %111, %114 : vector<16x16xf32>
    %c1_63 = arith.constant 1 : index
    %c4_64 = arith.constant 4 : index
    %116 = memref.load %arg4[%c1_63, %c4_64] : memref<8x5xf32, #tpu.memory_space<smem>>
    %117 = vector.broadcast %116 : f32 to vector<16x16xf32>
    %118 = arith.mulf %73, %117 : vector<16x16xf32>
    %119 = arith.addf %115, %118 : vector<16x16xf32>
    %c1_65 = arith.constant 1 : index
    %120 = memref.load %arg5[%c1_65] : memref<8xf32, #tpu.memory_space<smem>>
    %121 = vector.broadcast %120 : f32 to vector<16x16xf32>
    %122 = arith.addf %119, %121 : vector<16x16xf32>
    %cst_66 = arith.constant 0.000000e+00 : f32
    %123 = vector.broadcast %cst_66 : f32 to vector<16x16xf32>
    %124 = arith.maximumf %122, %123 : vector<16x16xf32>
    %c0_67 = arith.constant 0 : index
    %c1_68 = arith.constant 1 : index
    %c0_69 = arith.constant 0 : index
    %c0_70 = arith.constant 0 : index
    %125 = vector.load %arg6[%c0_67, %c1_68, %c0_69, %c0_70] : memref<1x8x16x16xf32, #tpu.memory_space<vmem>>, vector<1x1x16x16xf32>
    %126 = vector.shape_cast %125 : vector<1x1x16x16xf32> to vector<16x16xf32>
    %127 = vector.shape_cast %124 : vector<16x16xf32> to vector<1x1x16x16xf32>
    tpu.vector_store %arg6[%c0_67, %c1_68, %c0_69, %c0_70], %127 {strides = array<i32>} : memref<1x8x16x16xf32, #tpu.memory_space<vmem>>, vector<1x1x16x16xf32>,
    %c2_71 = arith.constant 2 : index
    %c0_72 = arith.constant 0 : index
    %128 = memref.load %arg4[%c2_71, %c0_72] : memref<8x5xf32, #tpu.memory_space<smem>>
    %129 = vector.broadcast %128 : f32 to vector<16x16xf32>
    %130 = arith.mulf %1, %129 : vector<16x16xf32>
    %c2_73 = arith.constant 2 : index
    %c1_74 = arith.constant 1 : index
    %131 = memref.load %arg4[%c2_73, %c1_74] : memref<8x5xf32, #tpu.memory_space<smem>>
    %132 = vector.broadcast %131 : f32 to vector<16x16xf32>
    %133 = arith.mulf %3, %132 : vector<16x16xf32>
    %134 = arith.addf %130, %133 : vector<16x16xf32>
    %c2_75 = arith.constant 2 : index
    %c2_76 = arith.constant 2 : index
    %135 = memref.load %arg4[%c2_75, %c2_76] : memref<8x5xf32, #tpu.memory_space<smem>>
    %136 = vector.broadcast %135 : f32 to vector<16x16xf32>
    %137 = arith.mulf %5, %136 : vector<16x16xf32>
    %138 = arith.addf %134, %137 : vector<16x16xf32>
    %c2_77 = arith.constant 2 : index
    %c3_78 = arith.constant 3 : index
    %139 = memref.load %arg4[%c2_77, %c3_78] : memref<8x5xf32, #tpu.memory_space<smem>>
    %140 = vector.broadcast %139 : f32 to vector<16x16xf32>
    %141 = arith.mulf %7, %140 : vector<16x16xf32>
    %142 = arith.addf %138, %141 : vector<16x16xf32>
    %c2_79 = arith.constant 2 : index
    %c4_80 = arith.constant 4 : index
    %143 = memref.load %arg4[%c2_79, %c4_80] : memref<8x5xf32, #tpu.memory_space<smem>>
    %144 = vector.broadcast %143 : f32 to vector<16x16xf32>
    %145 = arith.mulf %73, %144 : vector<16x16xf32>
    %146 = arith.addf %142, %145 : vector<16x16xf32>
    %c2_81 = arith.constant 2 : index
    %147 = memref.load %arg5[%c2_81] : memref<8xf32, #tpu.memory_space<smem>>
    %148 = vector.broadcast %147 : f32 to vector<16x16xf32>
    %149 = arith.addf %146, %148 : vector<16x16xf32>
    %cst_82 = arith.constant 0.000000e+00 : f32
    %150 = vector.broadcast %cst_82 : f32 to vector<16x16xf32>
    %151 = arith.maximumf %149, %150 : vector<16x16xf32>
    %c0_83 = arith.constant 0 : index
    %c2_84 = arith.constant 2 : index
    %c0_85 = arith.constant 0 : index
    %c0_86 = arith.constant 0 : index
    %152 = vector.load %arg6[%c0_83, %c2_84, %c0_85, %c0_86] : memref<1x8x16x16xf32, #tpu.memory_space<vmem>>, vector<1x1x16x16xf32>
    %153 = vector.shape_cast %152 : vector<1x1x16x16xf32> to vector<16x16xf32>
    %154 = vector.shape_cast %151 : vector<16x16xf32> to vector<1x1x16x16xf32>
    tpu.vector_store %arg6[%c0_83, %c2_84, %c0_85, %c0_86], %154 {strides = array<i32>} : memref<1x8x16x16xf32, #tpu.memory_space<vmem>>, vector<1x1x16x16xf32>,
    %c3_87 = arith.constant 3 : index
    %c0_88 = arith.constant 0 : index
    %155 = memref.load %arg4[%c3_87, %c0_88] : memref<8x5xf32, #tpu.memory_space<smem>>
    %156 = vector.broadcast %155 : f32 to vector<16x16xf32>
    %157 = arith.mulf %1, %156 : vector<16x16xf32>
    %c3_89 = arith.constant 3 : index
    %c1_90 = arith.constant 1 : index
    %158 = memref.load %arg4[%c3_89, %c1_90] : memref<8x5xf32, #tpu.memory_space<smem>>
    %159 = vector.broadcast %158 : f32 to vector<16x16xf32>
    %160 = arith.mulf %3, %159 : vector<16x16xf32>
    %161 = arith.addf %157, %160 : vector<16x16xf32>
    %c3_91 = arith.constant 3 : index
    %c2_92 = arith.constant 2 : index
    %162 = memref.load %arg4[%c3_91, %c2_92] : memref<8x5xf32, #tpu.memory_space<smem>>
    %163 = vector.broadcast %162 : f32 to vector<16x16xf32>
    %164 = arith.mulf %5, %163 : vector<16x16xf32>
    %165 = arith.addf %161, %164 : vector<16x16xf32>
    %c3_93 = arith.constant 3 : index
    %c3_94 = arith.constant 3 : index
    %166 = memref.load %arg4[%c3_93, %c3_94] : memref<8x5xf32, #tpu.memory_space<smem>>
    %167 = vector.broadcast %166 : f32 to vector<16x16xf32>
    %168 = arith.mulf %7, %167 : vector<16x16xf32>
    %169 = arith.addf %165, %168 : vector<16x16xf32>
    %c3_95 = arith.constant 3 : index
    %c4_96 = arith.constant 4 : index
    %170 = memref.load %arg4[%c3_95, %c4_96] : memref<8x5xf32, #tpu.memory_space<smem>>
    %171 = vector.broadcast %170 : f32 to vector<16x16xf32>
    %172 = arith.mulf %73, %171 : vector<16x16xf32>
    %173 = arith.addf %169, %172 : vector<16x16xf32>
    %c3_97 = arith.constant 3 : index
    %174 = memref.load %arg5[%c3_97] : memref<8xf32, #tpu.memory_space<smem>>
    %175 = vector.broadcast %174 : f32 to vector<16x16xf32>
    %176 = arith.addf %173, %175 : vector<16x16xf32>
    %cst_98 = arith.constant 0.000000e+00 : f32
    %177 = vector.broadcast %cst_98 : f32 to vector<16x16xf32>
    %178 = arith.maximumf %176, %177 : vector<16x16xf32>
    %c0_99 = arith.constant 0 : index
    %c3_100 = arith.constant 3 : index
    %c0_101 = arith.constant 0 : index
    %c0_102 = arith.constant 0 : index
    %179 = vector.load %arg6[%c0_99, %c3_100, %c0_101, %c0_102] : memref<1x8x16x16xf32, #tpu.memory_space<vmem>>, vector<1x1x16x16xf32>
    %180 = vector.shape_cast %179 : vector<1x1x16x16xf32> to vector<16x16xf32>
    %181 = vector.shape_cast %178 : vector<16x16xf32> to vector<1x1x16x16xf32>
    tpu.vector_store %arg6[%c0_99, %c3_100, %c0_101, %c0_102], %181 {strides = array<i32>} : memref<1x8x16x16xf32, #tpu.memory_space<vmem>>, vector<1x1x16x16xf32>,
    %c4_103 = arith.constant 4 : index
    %c0_104 = arith.constant 0 : index
    %182 = memref.load %arg4[%c4_103, %c0_104] : memref<8x5xf32, #tpu.memory_space<smem>>
    %183 = vector.broadcast %182 : f32 to vector<16x16xf32>
    %184 = arith.mulf %1, %183 : vector<16x16xf32>
    %c4_105 = arith.constant 4 : index
    %c1_106 = arith.constant 1 : index
    %185 = memref.load %arg4[%c4_105, %c1_106] : memref<8x5xf32, #tpu.memory_space<smem>>
    %186 = vector.broadcast %185 : f32 to vector<16x16xf32>
    %187 = arith.mulf %3, %186 : vector<16x16xf32>
    %188 = arith.addf %184, %187 : vector<16x16xf32>
    %c4_107 = arith.constant 4 : index
    %c2_108 = arith.constant 2 : index
    %189 = memref.load %arg4[%c4_107, %c2_108] : memref<8x5xf32, #tpu.memory_space<smem>>
    %190 = vector.broadcast %189 : f32 to vector<16x16xf32>
    %191 = arith.mulf %5, %190 : vector<16x16xf32>
    %192 = arith.addf %188, %191 : vector<16x16xf32>
    %c4_109 = arith.constant 4 : index
    %c3_110 = arith.constant 3 : index
    %193 = memref.load %arg4[%c4_109, %c3_110] : memref<8x5xf32, #tpu.memory_space<smem>>
    %194 = vector.broadcast %193 : f32 to vector<16x16xf32>
    %195 = arith.mulf %7, %194 : vector<16x16xf32>
    %196 = arith.addf %192, %195 : vector<16x16xf32>
    %c4_111 = arith.constant 4 : index
    %c4_112 = arith.constant 4 : index
    %197 = memref.load %arg4[%c4_111, %c4_112] : memref<8x5xf32, #tpu.memory_space<smem>>
    %198 = vector.broadcast %197 : f32 to vector<16x16xf32>
    %199 = arith.mulf %73, %198 : vector<16x16xf32>
    %200 = arith.addf %196, %199 : vector<16x16xf32>
    %c4_113 = arith.constant 4 : index
    %201 = memref.load %arg5[%c4_113] : memref<8xf32, #tpu.memory_space<smem>>
    %202 = vector.broadcast %201 : f32 to vector<16x16xf32>
    %203 = arith.addf %200, %202 : vector<16x16xf32>
    %cst_114 = arith.constant 0.000000e+00 : f32
    %204 = vector.broadcast %cst_114 : f32 to vector<16x16xf32>
    %205 = arith.maximumf %203, %204 : vector<16x16xf32>
    %c0_115 = arith.constant 0 : index
    %c4_116 = arith.constant 4 : index
    %c0_117 = arith.constant 0 : index
    %c0_118 = arith.constant 0 : index
    %206 = vector.load %arg6[%c0_115, %c4_116, %c0_117, %c0_118] : memref<1x8x16x16xf32, #tpu.memory_space<vmem>>, vector<1x1x16x16xf32>
    %207 = vector.shape_cast %206 : vector<1x1x16x16xf32> to vector<16x16xf32>
    %208 = vector.shape_cast %205 : vector<16x16xf32> to vector<1x1x16x16xf32>
    tpu.vector_store %arg6[%c0_115, %c4_116, %c0_117, %c0_118], %208 {strides = array<i32>} : memref<1x8x16x16xf32, #tpu.memory_space<vmem>>, vector<1x1x16x16xf32>,
    %c5 = arith.constant 5 : index
    %c0_119 = arith.constant 0 : index
    %209 = memref.load %arg4[%c5, %c0_119] : memref<8x5xf32, #tpu.memory_space<smem>>
    %210 = vector.broadcast %209 : f32 to vector<16x16xf32>
    %211 = arith.mulf %1, %210 : vector<16x16xf32>
    %c5_120 = arith.constant 5 : index
    %c1_121 = arith.constant 1 : index
    %212 = memref.load %arg4[%c5_120, %c1_121] : memref<8x5xf32, #tpu.memory_space<smem>>
    %213 = vector.broadcast %212 : f32 to vector<16x16xf32>
    %214 = arith.mulf %3, %213 : vector<16x16xf32>
    %215 = arith.addf %211, %214 : vector<16x16xf32>
    %c5_122 = arith.constant 5 : index
    %c2_123 = arith.constant 2 : index
    %216 = memref.load %arg4[%c5_122, %c2_123] : memref<8x5xf32, #tpu.memory_space<smem>>
    %217 = vector.broadcast %216 : f32 to vector<16x16xf32>
    %218 = arith.mulf %5, %217 : vector<16x16xf32>
    %219 = arith.addf %215, %218 : vector<16x16xf32>
    %c5_124 = arith.constant 5 : index
    %c3_125 = arith.constant 3 : index
    %220 = memref.load %arg4[%c5_124, %c3_125] : memref<8x5xf32, #tpu.memory_space<smem>>
    %221 = vector.broadcast %220 : f32 to vector<16x16xf32>
    %222 = arith.mulf %7, %221 : vector<16x16xf32>
    %223 = arith.addf %219, %222 : vector<16x16xf32>
    %c5_126 = arith.constant 5 : index
    %c4_127 = arith.constant 4 : index
    %224 = memref.load %arg4[%c5_126, %c4_127] : memref<8x5xf32, #tpu.memory_space<smem>>
    %225 = vector.broadcast %224 : f32 to vector<16x16xf32>
    %226 = arith.mulf %73, %225 : vector<16x16xf32>
    %227 = arith.addf %223, %226 : vector<16x16xf32>
    %c5_128 = arith.constant 5 : index
    %228 = memref.load %arg5[%c5_128] : memref<8xf32, #tpu.memory_space<smem>>
    %229 = vector.broadcast %228 : f32 to vector<16x16xf32>
    %230 = arith.addf %227, %229 : vector<16x16xf32>
    %cst_129 = arith.constant 0.000000e+00 : f32
    %231 = vector.broadcast %cst_129 : f32 to vector<16x16xf32>
    %232 = arith.maximumf %230, %231 : vector<16x16xf32>
    %c0_130 = arith.constant 0 : index
    %c5_131 = arith.constant 5 : index
    %c0_132 = arith.constant 0 : index
    %c0_133 = arith.constant 0 : index
    %233 = vector.load %arg6[%c0_130, %c5_131, %c0_132, %c0_133] : memref<1x8x16x16xf32, #tpu.memory_space<vmem>>, vector<1x1x16x16xf32>
    %234 = vector.shape_cast %233 : vector<1x1x16x16xf32> to vector<16x16xf32>
    %235 = vector.shape_cast %232 : vector<16x16xf32> to vector<1x1x16x16xf32>
    tpu.vector_store %arg6[%c0_130, %c5_131, %c0_132, %c0_133], %235 {strides = array<i32>} : memref<1x8x16x16xf32, #tpu.memory_space<vmem>>, vector<1x1x16x16xf32>,
    %c6 = arith.constant 6 : index
    %c0_134 = arith.constant 0 : index
    %236 = memref.load %arg4[%c6, %c0_134] : memref<8x5xf32, #tpu.memory_space<smem>>
    %237 = vector.broadcast %236 : f32 to vector<16x16xf32>
    %238 = arith.mulf %1, %237 : vector<16x16xf32>
    %c6_135 = arith.constant 6 : index
    %c1_136 = arith.constant 1 : index
    %239 = memref.load %arg4[%c6_135, %c1_136] : memref<8x5xf32, #tpu.memory_space<smem>>
    %240 = vector.broadcast %239 : f32 to vector<16x16xf32>
    %241 = arith.mulf %3, %240 : vector<16x16xf32>
    %242 = arith.addf %238, %241 : vector<16x16xf32>
    %c6_137 = arith.constant 6 : index
    %c2_138 = arith.constant 2 : index
    %243 = memref.load %arg4[%c6_137, %c2_138] : memref<8x5xf32, #tpu.memory_space<smem>>
    %244 = vector.broadcast %243 : f32 to vector<16x16xf32>
    %245 = arith.mulf %5, %244 : vector<16x16xf32>
    %246 = arith.addf %242, %245 : vector<16x16xf32>
    %c6_139 = arith.constant 6 : index
    %c3_140 = arith.constant 3 : index
    %247 = memref.load %arg4[%c6_139, %c3_140] : memref<8x5xf32, #tpu.memory_space<smem>>
    %248 = vector.broadcast %247 : f32 to vector<16x16xf32>
    %249 = arith.mulf %7, %248 : vector<16x16xf32>
    %250 = arith.addf %246, %249 : vector<16x16xf32>
    %c6_141 = arith.constant 6 : index
    %c4_142 = arith.constant 4 : index
    %251 = memref.load %arg4[%c6_141, %c4_142] : memref<8x5xf32, #tpu.memory_space<smem>>
    %252 = vector.broadcast %251 : f32 to vector<16x16xf32>
    %253 = arith.mulf %73, %252 : vector<16x16xf32>
    %254 = arith.addf %250, %253 : vector<16x16xf32>
    %c6_143 = arith.constant 6 : index
    %255 = memref.load %arg5[%c6_143] : memref<8xf32, #tpu.memory_space<smem>>
    %256 = vector.broadcast %255 : f32 to vector<16x16xf32>
    %257 = arith.addf %254, %256 : vector<16x16xf32>
    %cst_144 = arith.constant 0.000000e+00 : f32
    %258 = vector.broadcast %cst_144 : f32 to vector<16x16xf32>
    %259 = arith.maximumf %257, %258 : vector<16x16xf32>
    %c0_145 = arith.constant 0 : index
    %c6_146 = arith.constant 6 : index
    %c0_147 = arith.constant 0 : index
    %c0_148 = arith.constant 0 : index
    %260 = vector.load %arg6[%c0_145, %c6_146, %c0_147, %c0_148] : memref<1x8x16x16xf32, #tpu.memory_space<vmem>>, vector<1x1x16x16xf32>
    %261 = vector.shape_cast %260 : vector<1x1x16x16xf32> to vector<16x16xf32>
    %262 = vector.shape_cast %259 : vector<16x16xf32> to vector<1x1x16x16xf32>
    tpu.vector_store %arg6[%c0_145, %c6_146, %c0_147, %c0_148], %262 {strides = array<i32>} : memref<1x8x16x16xf32, #tpu.memory_space<vmem>>, vector<1x1x16x16xf32>,
    %c7 = arith.constant 7 : index
    %c0_149 = arith.constant 0 : index
    %263 = memref.load %arg4[%c7, %c0_149] : memref<8x5xf32, #tpu.memory_space<smem>>
    %264 = vector.broadcast %263 : f32 to vector<16x16xf32>
    %265 = arith.mulf %1, %264 : vector<16x16xf32>
    %c7_150 = arith.constant 7 : index
    %c1_151 = arith.constant 1 : index
    %266 = memref.load %arg4[%c7_150, %c1_151] : memref<8x5xf32, #tpu.memory_space<smem>>
    %267 = vector.broadcast %266 : f32 to vector<16x16xf32>
    %268 = arith.mulf %3, %267 : vector<16x16xf32>
    %269 = arith.addf %265, %268 : vector<16x16xf32>
    %c7_152 = arith.constant 7 : index
    %c2_153 = arith.constant 2 : index
    %270 = memref.load %arg4[%c7_152, %c2_153] : memref<8x5xf32, #tpu.memory_space<smem>>
    %271 = vector.broadcast %270 : f32 to vector<16x16xf32>
    %272 = arith.mulf %5, %271 : vector<16x16xf32>
    %273 = arith.addf %269, %272 : vector<16x16xf32>
    %c7_154 = arith.constant 7 : index
    %c3_155 = arith.constant 3 : index
    %274 = memref.load %arg4[%c7_154, %c3_155] : memref<8x5xf32, #tpu.memory_space<smem>>
    %275 = vector.broadcast %274 : f32 to vector<16x16xf32>
    %276 = arith.mulf %7, %275 : vector<16x16xf32>
    %277 = arith.addf %273, %276 : vector<16x16xf32>
    %c7_156 = arith.constant 7 : index
    %c4_157 = arith.constant 4 : index
    %278 = memref.load %arg4[%c7_156, %c4_157] : memref<8x5xf32, #tpu.memory_space<smem>>
    %279 = vector.broadcast %278 : f32 to vector<16x16xf32>
    %280 = arith.mulf %73, %279 : vector<16x16xf32>
    %281 = arith.addf %277, %280 : vector<16x16xf32>
    %c7_158 = arith.constant 7 : index
    %282 = memref.load %arg5[%c7_158] : memref<8xf32, #tpu.memory_space<smem>>
    %283 = vector.broadcast %282 : f32 to vector<16x16xf32>
    %284 = arith.addf %281, %283 : vector<16x16xf32>
    %cst_159 = arith.constant 0.000000e+00 : f32
    %285 = vector.broadcast %cst_159 : f32 to vector<16x16xf32>
    %286 = arith.maximumf %284, %285 : vector<16x16xf32>
    %c0_160 = arith.constant 0 : index
    %c7_161 = arith.constant 7 : index
    %c0_162 = arith.constant 0 : index
    %c0_163 = arith.constant 0 : index
    %287 = vector.load %arg6[%c0_160, %c7_161, %c0_162, %c0_163] : memref<1x8x16x16xf32, #tpu.memory_space<vmem>>, vector<1x1x16x16xf32>
    %288 = vector.shape_cast %287 : vector<1x1x16x16xf32> to vector<16x16xf32>
    %289 = vector.shape_cast %286 : vector<16x16xf32> to vector<1x1x16x16xf32>
    tpu.vector_store %arg6[%c0_160, %c7_161, %c0_162, %c0_163], %289 {strides = array<i32>} : memref<1x8x16x16xf32, #tpu.memory_space<vmem>>, vector<1x1x16x16xf32>,
    return
  }
  func.func @transform_0(%arg0: i32, %arg1: i32) -> (i32, i32, i32, i32) {
    %c0_i32 = arith.constant 0 : i32
    %c0_i32_0 = arith.constant 0 : i32
    %c0_i32_1 = arith.constant 0 : i32
    return %arg0, %c0_i32, %arg1, %c0_i32_0 : i32, i32, i32, i32
  }
  func.func @transform_1(%arg0: i32, %arg1: i32) -> (i32, i32, i32, i32) {
    %c0_i32 = arith.constant 0 : i32
    %c0_i32_0 = arith.constant 0 : i32
    %c0_i32_1 = arith.constant 0 : i32
    return %arg0, %arg1, %c0_i32, %c0_i32_0 : i32, i32, i32, i32
  }
  func.func @transform_2(%arg0: i32, %arg1: i32) -> (i32, i32) {
    %c0_i32 = arith.constant 0 : i32
    %c0_i32_0 = arith.constant 0 : i32
    %c0_i32_1 = arith.constant 0 : i32
    return %c0_i32, %c0_i32_0 : i32, i32
  }
  func.func @transform_3(%arg0: i32, %arg1: i32) -> i32 {
    %c0_i32 = arith.constant 0 : i32
    %c0_i32_0 = arith.constant 0 : i32
    return %c0_i32 : i32
  }
  func.func @transform_4(%arg0: i32, %arg1: i32) -> (i32, i32, i32, i32) {
    %c0_i32 = arith.constant 0 : i32
    %c0_i32_0 = arith.constant 0 : i32
    %c0_i32_1 = arith.constant 0 : i32
    return %arg0, %c0_i32, %arg1, %c0_i32_0 : i32, i32, i32, i32
  }
}

</mosaic_0001>

<llo_original>
// kernel: tpu_custom_call.1
$region0: #{tpu_custom_call.1}
  #allocation0 [shape = 'u32[]', space=smem, size = 0x4, offset = 0x4, fixed_abs, tag = 'smem constant byte address 0x4 - core index']
  #allocation1 [shape = 'u32[144,128]{1,0:T(1,128)}', space=vmem, size = 0x12000, scoped, tag = 'internal scratch']
  %s0 = inlined_call_operand.hbm [shape: f32[2,4,16,16], index: 0, kind: input, shape index: {}]
  %s1 = inlined_call_operand.hbm [shape: f32[2,1,2,16], index: 1, kind: input, shape index: {}]
  %s2 = inlined_call_operand.hbm [shape: f32[8,5], index: 2, kind: input, shape index: {}]
  %s3 = inlined_call_operand.vmem [shape: f32[8], index: 3, kind: input, shape index: {}]
  %s4 = inlined_call_operand.hbm [shape: f32[2,8,16,16], index: 4, kind: output, shape index: {}]
  %s5 = sld [smem:[#allocation0]]
  $region65: #{tpu_custom_call.1} parent=0
    _
  %s7 = ssub.s32 1, %s5
  %s8 = scalar_select 0, %s7, %s5
  $region1: #{tpu_custom_call.1} parent=0
    #allocation2 [shape = 'u8[65536]{0}', space=vmem, size = 0x10000, scoped, tag = 'input window, operand 0']
    #allocation3 [shape = 's32[2]{0}', space=sflag, size = 0x8, scoped, tag = 'scoped memory for tpu_custom_call.1']
    #allocation4 [shape = 's32[2]{0}', space=sflag, size = 0x8, scoped, tag = 'scoped memory for tpu_custom_call.1']
    #allocation5 [shape = 's32[2]{0}', space=sflag, size = 0x8, scoped, tag = 'scoped memory for tpu_custom_call.1']
    #allocation6 [shape = 's32[2]{0}', space=sflag, size = 0x8, scoped, tag = 'scoped memory for tpu_custom_call.1']
    #allocation7 [shape = 'u8[2048]{0}', space=vmem, size = 0x800, scoped, tag = 'input window, operand 1']
    #allocation8 [shape = 's32[2]{0}', space=sflag, size = 0x8, scoped, tag = 'scoped memory for tpu_custom_call.1']
    #allocation9 [shape = 'u8[4096]{0}', space=smem, size = 0x1000, scoped, tag = 'input window, operand 2, single buffered']
    #allocation10 [shape = 'u8[512]{0}', space=smem, size = 0x200, scoped, tag = 'input window, operand 3, single buffered']
    #allocation11 [shape = 'u8[131072]{0}', space=vmem, size = 0x20000, scoped, tag = 'output window, operand 0']
    %9 = vsyncpa [#allocation3], 0
    %s10 = scalar_lea.sflag [#allocation3], 1
    %11 = vsyncpa %s10, 0
    %12 = vsyncpa [#allocation8], 0
    %s13 = scalar_lea.sflag [#allocation8], 1
    %14 = vsyncpa %s13, 0
    %15 = vsyncpa [#allocation5], 0
    %16 = vsyncpa [#allocation6], 0
    %17 = vsyncpa [#allocation4], 0
    %s18 = scalar_lea.sflag [#allocation4], 1
    %19 = vsyncpa %s18, 0
    loop: start=0, step=1, limit=4
    $region2: #{tpu_custom_call.1} parent=1 // loop_pre_header
      _
    $region3: #{tpu_custom_call.1} parent=1 // loop_header
      %s21 = sphi 0, %s25
      %p22 = scmp.ge.s32.totalorder %s21, 4
      %s28 = sphi 0, %s40
      %s29 = sphi 0, %s36
      %s30 = sphi 0, %s28
      %s31 = sphi 0, %s29
      %s32 = sphi 0, %s30
      %s33 = sphi 0, %s31
      %s45 = sphi 0, %s47
      %s48 = sphi 0, %s45
      %s49 = sphi 0, %s48
      %s65 = sphi 0, %s49
      %s73 = sphi 0, %s75
      %s76 = sphi 0, %s73
      %s77 = sphi 0, %s76
      %s93 = sphi 0, %s77
      %s97 = sphi 0, %s97
      %s99 = sphi 0, %s97
      %s100 = sphi 0, %s99
      %s114 = sphi 0, %s100
      %s118 = sphi 0, %s118
      %s120 = sphi 0, %s118
      %s121 = sphi 0, %s120
      %s135 = sphi 0, %s121
      %s143 = sphi 0, %s145
      %s146 = sphi 0, %s143
      %s147 = sphi 0, %s146
      %s163 = sphi 0, %s147
    $region4: #{tpu_custom_call.1} parent=1 // loop_header_branch
      %24 = sbr.rel (%p22) target = $region8
    $region5: #{tpu_custom_call.1} parent=1 // loop_body
      %s26 = ssub.s32 %s21, 1
      %s27 = ssub.s32 %s21, 2
      %s34 = sadd.s32 1, %s29
      %p35 = scmp.ge.s32.totalorder %s34, 1
      %s36 = scalar_select %p35, 0, %s34
      %s37 = sadd.s32 1, %s28
      %s38 = scalar_select %p35, %s37, %s28
      %p39 = scmp.ge.s32.totalorder %s38, 2
      %s40 = scalar_select %p39, 0, %s38
      %s41 = ssub.s32 %s28, %s40
      %s42 = ssub.s32 %s29, %s36
      %s43 = sor.u32 %s41, %s42
      %p44 = scmp.eq.s32.totalorder %s43, 0
      %s46 = sadd.s32 %s45, 1
      %s47 = scalar_select %p44, %s45, %s46
      %p50 = pneg %p44
      %p51 = scmp.eq.s32.totalorder %s21, 1
      %p52 = por %p50, %p51
      %p53 = scmp.ne.s32.totalorder %s45, %s48
      %p54 = scmp.eq.s32.totalorder %s21, 0
      %p55 = por %p53, %p54
      %p56 = scmp.ne.s32.totalorder %s45, %s48
      %p57 = scmp.eq.s32.totalorder %s26, 1
      %p58 = por %p56, %p57
      %p59 = scmp.ne.s32.totalorder %s48, %s49
      %p60 = scmp.eq.s32.totalorder %s26, 0
      %p61 = por %p59, %p60
      %p62 = scmp.ne.s32.totalorder %s48, %s49
      %p63 = scmp.eq.s32.totalorder %s27, 1
      %p64 = por %p62, %p63
      %p66 = scmp.ne.s32.totalorder %s49, %s65
      %p67 = scmp.eq.s32.totalorder %s27, 0
      %p68 = por %p66, %p67
      %s69 = ssub.s32 %s28, %s40
      %s70 = ssub.s32 %s29, %s36
      %s71 = sor.u32 %s69, %s70
      %p72 = scmp.eq.s32.totalorder %s71, 0
      %s74 = sadd.s32 %s73, 1
      %s75 = scalar_select %p72, %s73, %s74
      %p78 = pneg %p72
      %p79 = scmp.eq.s32.totalorder %s21, 1
      %p80 = por %p78, %p79
      %p81 = scmp.ne.s32.totalorder %s73, %s76
      %p82 = scmp.eq.s32.totalorder %s21, 0
      %p83 = por %p81, %p82
      %p84 = scmp.ne.s32.totalorder %s73, %s76
      %p85 = scmp.eq.s32.totalorder %s26, 1
      %p86 = por %p84, %p85
      %p87 = scmp.ne.s32.totalorder %s76, %s77
      %p88 = scmp.eq.s32.totalorder %s26, 0
      %p89 = por %p87, %p88
      %p90 = scmp.ne.s32.totalorder %s76, %s77
      %p91 = scmp.eq.s32.totalorder %s27, 1
      %p92 = por %p90, %p91
      %p94 = scmp.ne.s32.totalorder %s77, %s93
      %p95 = scmp.eq.s32.totalorder %s27, 0
      %p96 = por %p94, %p95
      %s98 = sadd.s32 %s97, 1
      %p101 = scmp.eq.s32.totalorder %s21, 1
      %p102 = scmp.ne.s32.totalorder %s97, %s99
      %p103 = scmp.eq.s32.totalorder %s21, 0
      %p104 = por %p102, %p103
      %p105 = scmp.ne.s32.totalorder %s97, %s99
      %p106 = scmp.eq.s32.totalorder %s26, 1
      %p107 = por %p105, %p106
      %p108 = scmp.ne.s32.totalorder %s99, %s100
      %p109 = scmp.eq.s32.totalorder %s26, 0
      %p110 = por %p108, %p109
      %p111 = scmp.ne.s32.totalorder %s99, %s100
      %p112 = scmp.eq.s32.totalorder %s27, 1
      %p113 = por %p111, %p112
      %p115 = scmp.ne.s32.totalorder %s100, %s114
      %p116 = scmp.eq.s32.totalorder %s27, 0
      %p117 = por %p115, %p116
      %s119 = sadd.s32 %s118, 1
      %p122 = scmp.eq.s32.totalorder %s21, 1
      %p123 = scmp.ne.s32.totalorder %s118, %s120
      %p124 = scmp.eq.s32.totalorder %s21, 0
      %p125 = por %p123, %p124
      %p126 = scmp.ne.s32.totalorder %s118, %s120
      %p127 = scmp.eq.s32.totalorder %s26, 1
      %p128 = por %p126, %p127
      %p129 = scmp.ne.s32.totalorder %s120, %s121
      %p130 = scmp.eq.s32.totalorder %s26, 0
      %p131 = por %p129, %p130
      %p132 = scmp.ne.s32.totalorder %s120, %s121
      %p133 = scmp.eq.s32.totalorder %s27, 1
      %p134 = por %p132, %p133
      %p136 = scmp.ne.s32.totalorder %s121, %s135
      %p137 = scmp.eq.s32.totalorder %s27, 0
      %p138 = por %p136, %p137
      %s139 = ssub.s32 %s28, %s40
      %s140 = ssub.s32 %s29, %s36
      %s141 = sor.u32 %s139, %s140
      %p142 = scmp.eq.s32.totalorder %s141, 0
      %s144 = sadd.s32 %s143, 1
      %s145 = scalar_select %p142, %s143, %s144
      %p148 = pneg %p142
      %p149 = scmp.eq.s32.totalorder %s21, 1
      %p150 = por %p148, %p149
      %p151 = scmp.ne.s32.totalorder %s143, %s146
      %p152 = scmp.eq.s32.totalorder %s21, 0
      %p153 = por %p151, %p152
      %p154 = scmp.ne.s32.totalorder %s143, %s146
      %p155 = scmp.eq.s32.totalorder %s26, 1
      %p156 = por %p154, %p155
      %p157 = scmp.ne.s32.totalorder %s146, %s147
      %p158 = scmp.eq.s32.totalorder %s26, 0
      %p159 = por %p157, %p158
      %p160 = scmp.ne.s32.totalorder %s146, %s147
      %p161 = scmp.eq.s32.totalorder %s27, 1
      %p162 = por %p160, %p161
      %p164 = scmp.ne.s32.totalorder %s147, %s163
      %p165 = scmp.eq.s32.totalorder %s27, 0
      %p166 = por %p164, %p165
      %p167 = scmp.le.s32.totalorder 1, %s21
      %p168 = scmp.lt.s32.totalorder %s21, 3
      %p169 = pnand %p167, %p168
      %p170 = pneg %p169
      // Predicated region
      $region9: #{tpu_custom_call.1} parent=5 // pred_check
        _
      $region10: #{tpu_custom_call.1} parent=5 // pred_check_branch
        %172 = sbr.rel (%p169) target = $region12
      $region11: #{tpu_custom_call.1} parent=5 // pred_region
        %s173 = ssub.s32 %s21, 1
        // Predicated region
        $region13: #{tpu_custom_call.1} parent=11 // pred_check
          %p174 = pneg %p110
        $region14: #{tpu_custom_call.1} parent=11 // pred_check_branch
          %176 = sbr.rel (%p174) target = $region16
        $region15: #{tpu_custom_call.1} parent=11 // pred_region
          %s178 = ssub.s32 128, 128
          %179 = vsyncadd [#allocation5], %s178
          %182 = dma.hbm_to_smem %s2, 128, [#allocation9], [#allocation5]
        $region16: #{tpu_custom_call.1} parent=11 // pred_fallthru
          _
        // Predicated region
        $region17: #{tpu_custom_call.1} parent=11 // pred_check
          %p183 = pneg %p131
        $region18: #{tpu_custom_call.1} parent=11 // pred_check_branch
          %185 = sbr.rel (%p183) target = $region20
        $region19: #{tpu_custom_call.1} parent=11 // pred_region
          %s187 = ssub.s32 16, 16
          %188 = vsyncadd [#allocation6], %s187
          %s190 = sshll.u32 %s3, 4
          %s191 = int_to_ptr.vmem [resolvable:$true] %s190
          %193 = dma.vmem_to_smem %s191, 16, [#allocation10], [#allocation6]
        $region20: #{tpu_custom_call.1} parent=11 // pred_fallthru
          _
      $region12: #{tpu_custom_call.1} parent=5 // pred_fallthru
        _
      %p194 = scmp.lt.s32.totalorder %s21, 2
      // Predicated region
      $region21: #{tpu_custom_call.1} parent=5 // pred_check
        %p195 = pneg %p194
      $region22: #{tpu_custom_call.1} parent=5 // pred_check_branch
        %197 = sbr.rel (%p195) target = $region24
      $region23: #{tpu_custom_call.1} parent=5 // pred_region
        // Predicated region
        $region25: #{tpu_custom_call.1} parent=23 // pred_check
          %p198 = pneg %p55
        $region26: #{tpu_custom_call.1} parent=23 // pred_check_branch
          %200 = sbr.rel (%p198) target = $region28
        $region27: #{tpu_custom_call.1} parent=23 // pred_region
          %s201 = sand.u32 %s45, 1
          %s202 = scalar_lea.sflag [#allocation3], %s201
          %s203 = sand.u32 %s45, 1
          %s204 = smul.addr %s203, 64
          %s205 = scalar_lea.vmem [#allocation2], %s204
          %s206 = smul.u32 2, %s29
          %s208 = ssub.s32 1024, 1024
          %209 = vsyncadd %s202, %s208
          %s210 = smul.addr %s28, 8
          %s211 = sadd.s32 %s206, %s210
          %s212 = smul.addr %s211, 128
          %s213 = scalar_lea.hbm %s0, %s212
          %s214 = sshll.u32 %s205, 4
          %s215 = int_to_ptr.vmem [resolvable:$true] %s214
          %220 = dma.hbm_to_vmem [thread:$0]  %s213, 1024, %s215, %s202, 128, 128, 8
        $region28: #{tpu_custom_call.1} parent=23 // pred_fallthru
          _
        // Predicated region
        $region29: #{tpu_custom_call.1} parent=23 // pred_check
          %p221 = pneg %p83
        $region30: #{tpu_custom_call.1} parent=23 // pred_check_branch
          %223 = sbr.rel (%p221) target = $region32
        $region31: #{tpu_custom_call.1} parent=23 // pred_region
          %s224 = sand.u32 %s73, 1
          %s225 = scalar_lea.sflag [#allocation8], %s224
          %s226 = sand.u32 %s73, 1
          %s227 = smul.addr %s226, 2
          %s228 = scalar_lea.vmem [#allocation7], %s227
          %s230 = ssub.s32 32, 32
          %231 = vsyncadd %s225, %s230
          %s232 = sadd.s32 %s29, %s28
          %s233 = smul.addr %s232, 32
          %s234 = scalar_lea.hbm %s1, %s233
          %s236 = sshll.u32 %s228, 4
          %s237 = int_to_ptr.vmem [resolvable:$true] %s236
          %239 = dma.hbm_to_vmem [thread:$0]  %s234, 32, %s237, %s225
        $region32: #{tpu_custom_call.1} parent=23 // pred_fallthru
          _
      $region24: #{tpu_custom_call.1} parent=5 // pred_fallthru
        _
      %p240 = scmp.le.s32.totalorder 1, %s21
      %p241 = scmp.lt.s32.totalorder %s21, 3
      %p242 = pnand %p240, %p241
      %p243 = pneg %p242
      // Predicated region
      $region33: #{tpu_custom_call.1} parent=5 // pred_check
        _
      $region34: #{tpu_custom_call.1} parent=5 // pred_check_branch
        %245 = sbr.rel (%p242) target = $region36
      $region35: #{tpu_custom_call.1} parent=5 // pred_region
        %s246 = ssub.s32 %s21, 1
        %s247 = sand.u32 %s48, 1
        %s248 = scalar_lea.sflag [#allocation3], %s247
        %s249 = sand.u32 %s48, 1
        %s250 = smul.addr %s249, 64
        %s251 = scalar_lea.vmem [#allocation2], %s250
        // Predicated region
        $region37: #{tpu_custom_call.1} parent=35 // pred_check
          %p252 = pneg %p61
        $region38: #{tpu_custom_call.1} parent=35 // pred_check_branch
          %254 = sbr.rel (%p252) target = $region40
        $region39: #{tpu_custom_call.1} parent=35 // pred_region
          %255 = dma.done %s248, 1024
        $region40: #{tpu_custom_call.1} parent=35 // pred_fallthru
          _
        %s256 = sand.u32 %s76, 1
        %s257 = scalar_lea.sflag [#allocation8], %s256
        %s258 = sand.u32 %s76, 1
        %s259 = smul.addr %s258, 2
        %s260 = scalar_lea.vmem [#allocation7], %s259
        // Predicated region
        $region41: #{tpu_custom_call.1} parent=35 // pred_check
          %p261 = pneg %p89
        $region42: #{tpu_custom_call.1} parent=35 // pred_check_branch
          %263 = sbr.rel (%p261) target = $region44
        $region43: #{tpu_custom_call.1} parent=35 // pred_region
          %264 = dma.done %s257, 32
        $region44: #{tpu_custom_call.1} parent=35 // pred_fallthru
          _
        // Predicated region
        $region45: #{tpu_custom_call.1} parent=35 // pred_check
          %p265 = pneg %p110
        $region46: #{tpu_custom_call.1} parent=35 // pred_check_branch
          %267 = sbr.rel (%p265) target = $region48
        $region47: #{tpu_custom_call.1} parent=35 // pred_region
          %268 = dma.done [#allocation5], 128
        $region48: #{tpu_custom_call.1} parent=35 // pred_fallthru
          _
        // Predicated region
        $region49: #{tpu_custom_call.1} parent=35 // pred_check
          %p269 = pneg %p131
        $region50: #{tpu_custom_call.1} parent=35 // pred_check_branch
          %271 = sbr.rel (%p269) target = $region52
        $region51: #{tpu_custom_call.1} parent=35 // pred_region
          %272 = dma.done [#allocation6], 16
        $region52: #{tpu_custom_call.1} parent=35 // pred_fallthru
          _
        %273 = sfence
        %s274 = sand.u32 %s48, 1
        %s275 = scalar_lea.sflag [#allocation3], %s274
        %s276 = sand.u32 %s48, 1
        %s277 = smul.addr %s276, 64
        %s278 = scalar_lea.vmem [#allocation2], %s277
        %p279 = pneg %p61
        %p280 = pneg %p58
        %s281 = sand.u32 %s76, 1
        %s282 = scalar_lea.sflag [#allocation8], %s281
        %s283 = sand.u32 %s76, 1
        %s284 = smul.addr %s283, 2
        %s285 = scalar_lea.vmem [#allocation7], %s284
        %p286 = pneg %p89
        %p287 = pneg %p86
        %p288 = pneg %p110
        %p289 = pneg %p107
        %p290 = pneg %p131
        %p291 = pneg %p128
        %p292 = pneg %p159
        %p293 = pneg %p156
        %s294 = sand.u32 %s146, 1
        %s295 = scalar_lea.sflag [#allocation4], %s294
        %s296 = sand.u32 %s146, 1
        %s297 = smul.addr %s296, 128
        %s298 = scalar_lea.vmem [#allocation11], %s297
        %s299 = smul.u32 2, %s31
        %s300 = smul.u32 2, %s31
        %v301 = vld [vmem:[%s251] sm:$0xff]
        %v302 = vld [vmem:[%s251 + $0x8] sm:$0xff]
        %s303 = scalar_lea.vmem %s251, 16 [#allocation2]
        %v304 = vld [vmem:[%s303] sm:$0xff]
        %v305 = vld [vmem:[%s303 + $0x8] sm:$0xff]
        %s306 = scalar_lea.vmem %s251, 32 [#allocation2]
        %v307 = vld [vmem:[%s306] sm:$0xff]
        %v308 = vld [vmem:[%s306 + $0x8] sm:$0xff]
        %s309 = scalar_lea.vmem %s251, 48 [#allocation2]
        %v310 = vld [vmem:[%s309] sm:$0xff]
        %v311 = vld [vmem:[%s309 + $0x8] sm:$0xff]
        %v312 = vmul.f32 %v301, 0.2989
        %v313 = vmul.f32 %v302, 0.2989
        %v314 = vmul.f32 %v304, 0.587
        %v315 = vmul.f32 %v305, 0.587
        %v316 = vadd.f32 %v312, %v314
        %v317 = vadd.f32 %v313, %v315
        %v318 = vmul.f32 %v307, 0.114
        %v319 = vmul.f32 %v308, 0.114
        %v320 = vadd.f32 %v316, %v318
        %v321 = vadd.f32 %v317, %v319
        %v322 = vfloor.f32 %v320
        %v323 = vfloor.f32 %v321
        %v324 = vmax.f32 %v322, 0.0
        %v325 = vmax.f32 %v323, 0.0
        %v326 = vmin.f32 %v324, 255.0
        %v327 = vmin.f32 %v325, 255.0
        %v328 = vld [vmem:[%s260] sm:$0x1]
        %v329 = vfloor.f32 %v328
        %v330 = vmax.f32 %v329, 0.0
        %v331 = vmin.f32 %v330, 255.0
        %v332 = vld [vmem:[%s260 + $0x1] sm:$0x1]
        %v333 = vfloor.f32 %v332
        %v334 = vmax.f32 %v333, 0.0
        %v335 = vmin.f32 %v334, 255.0
        %vm338 = vcmask 1040384
        %v339 = vrot.slane %v326, 7
        %v340 = vrot.slane %v327, 7
        %v341 = vsel %vm338, %v339, %v340
        %v344 = vsel %vm338, %v331, %v339
        %vm345 = vcmask 1046528
        %v346 = vrot.slane %v326, 1
        %v347 = vrot.slane %v327, 1
        %v348 = vsel %vm345, %v346, %v347
        %v352 = vrot.slane %v335, 1
        %v354 = vsel %vm345, %v347, %v352
        %v355 = vlaneseq
        %v356 = vand.u32 %v355, 127
        %vm357 = vcmp.eq.s32.totalorder %v356, 0
        %vm358 = vcmp.eq.s32.totalorder %v356, 15
        %v359 = vmul.f32 %v326, 2.0
        %v360 = vmul.f32 %v327, 2.0
        %v361 = vadd.f32 %v344, %v359
        %v362 = vadd.f32 %v341, %v360
        %v363 = vadd.f32 %v361, %v348
        %v364 = vadd.f32 %v362, %v354
        %vm365 = vcmask 1047680
        %366 = vrot.lane.b32.xlu0 %v363, 16
        %v367 = vpop.permute.xlu0 %366
        %v368 = vsel %vm365, %v367, %v363
        %369 = vrot.lane.b32.xlu0 %v364, 16
        %v370 = vpop.permute.xlu0 %369
        %v371 = vsel %vm365, %v370, %v364
        %372 = vrot.lane.b32.xlu0 %v368, 16
        %v373 = vpop.permute.xlu0 %372
        %374 = vrot.lane.b32.xlu0 %v371, 16
        %v375 = vpop.permute.xlu0 %374
        %v376 = vsel %vm365, %v373, %v363
        %v377 = vsel %vm365, %v375, %v364
        %380 = vrot.lane.b32.xlu0 %v376, 127
        %v381 = vpop.permute.xlu0 %380
        %382 = vrot.lane.b32.xlu0 %v377, 127
        %v383 = vpop.permute.xlu0 %382
        %v386 = vsel %vm358, 0.0, %v381
        %v387 = vsel %vm358, 0.0, %v383
        %388 = vrot.lane.b32.xlu0 %v376, 113
        %v389 = vpop.permute.xlu0 %388
        %390 = vrot.lane.b32.xlu0 %v377, 113
        %v391 = vpop.permute.xlu0 %390
        %v394 = vsel %vm357, 0.0, %v389
        %v395 = vsel %vm357, 0.0, %v391
        %v396 = vsub.f32 %v386, %v394
        %v397 = vsub.f32 %v387, %v395
        %v398 = vsub.f32 %v348, %v344
        %v399 = vsub.f32 %v354, %v341
        %400 = vrot.lane.b32.xlu0 %v398, 16
        %v401 = vpop.permute.xlu0 %400
        %v402 = vsel %vm365, %v401, %v398
        %403 = vrot.lane.b32.xlu0 %v399, 16
        %v404 = vpop.permute.xlu0 %403
        %v405 = vsel %vm365, %v404, %v399
        %406 = vrot.lane.b32.xlu0 %v402, 16
        %v407 = vpop.permute.xlu0 %406
        %408 = vrot.lane.b32.xlu0 %v405, 16
        %v409 = vpop.permute.xlu0 %408
        %v410 = vsel %vm365, %v407, %v398
        %v411 = vsel %vm365, %v409, %v399
        %414 = vrot.lane.b32.xlu0 %v410, 113
        %v415 = vpop.permute.xlu0 %414
        %416 = vrot.lane.b32.xlu0 %v411, 113
        %v417 = vpop.permute.xlu0 %416
        %v420 = vsel %vm357, 0.0, %v415
        %v421 = vsel %vm357, 0.0, %v417
        %v422 = vmul.f32 %v398, 2.0
        %v423 = vmul.f32 %v399, 2.0
        %v424 = vadd.f32 %v420, %v422
        %v425 = vadd.f32 %v421, %v423
        %426 = vrot.lane.b32.xlu0 %v410, 127
        %v427 = vpop.permute.xlu0 %426
        %428 = vrot.lane.b32.xlu0 %v411, 127
        %v429 = vpop.permute.xlu0 %428
        %v432 = vsel %vm358, 0.0, %v427
        %v433 = vsel %vm358, 0.0, %v429
        %v434 = vadd.f32 %v424, %v432
        %v435 = vadd.f32 %v425, %v433
        %v436 = vmul.f32 %v396, %v396
        %v437 = vmul.f32 %v397, %v397
        %v438 = vmul.f32 %v434, %v434
        %v439 = vmul.f32 %v435, %v435
        %v440 = vadd.f32 %v436, %v438
        %v441 = vadd.f32 %v437, %v439
        %vm442 = vcmp.ge.f32.partialorder %v440, 22500.0
        %vm443 = vcmp.ge.f32.partialorder %v441, 22500.0
        %v444 = vsel %vm442, 255.0, 0.0
        %v445 = vsel %vm443, 255.0, 0.0
        %s446 = sld [smem:[#allocation9]]
        %v447 = vstv %s446
        %v448 = vmul.f32 %v301, %v447
        %v449 = vmul.f32 %v302, %v447
        %s450 = sld [smem:[#allocation9 + $0x1]]
        %v451 = vstv %s450
        %v452 = vmul.f32 %v304, %v451
        %v453 = vmul.f32 %v305, %v451
        %v454 = vadd.f32 %v448, %v452
        %v455 = vadd.f32 %v449, %v453
        %s456 = sld [smem:[#allocation9 + $0x2]]
        %v457 = vstv %s456
        %v458 = vmul.f32 %v307, %v457
        %v459 = vmul.f32 %v308, %v457
        %v460 = vadd.f32 %v454, %v458
        %v461 = vadd.f32 %v455, %v459
        %s462 = sld [smem:[#allocation9 + $0x3]]
        %v463 = vstv %s462
        %v464 = vmul.f32 %v310, %v463
        %v465 = vmul.f32 %v311, %v463
        %v466 = vadd.f32 %v460, %v464
        %v467 = vadd.f32 %v461, %v465
        %s468 = sld [smem:[#allocation9 + $0x4]]
        %v469 = vstv %s468
        %v470 = vmul.f32 %v444, %v469
        %v471 = vmul.f32 %v445, %v469
        %v472 = vadd.f32 %v466, %v470
        %v473 = vadd.f32 %v467, %v471
        %s474 = sld [smem:[#allocation10]]
        %v475 = vstv %s474
        %v476 = vadd.f32 %v472, %v475
        %v477 = vadd.f32 %v473, %v475
        %v478 = vmax.f32 %v476, 0.0
        %v479 = vmax.f32 %v477, 0.0
        %vm480 = vcmask 130048
        %481 = vst.msk [vmem:[%s298] sm:$0xff] %vm480, %v478
        %482 = vst.msk [vmem:[%s298 + $0x8] sm:$0xff] %vm480, %v479
        %s483 = sld [smem:[#allocation9 + $0x80]]
        %v484 = vstv %s483
        %v485 = vmul.f32 %v301, %v484
        %v486 = vmul.f32 %v302, %v484
        %s487 = sld [smem:[#allocation9 + $0x81]]
        %v488 = vstv %s487
        %v489 = vmul.f32 %v304, %v488
        %v490 = vmul.f32 %v305, %v488
        %v491 = vadd.f32 %v485, %v489
        %v492 = vadd.f32 %v486, %v490
        %s493 = sld [smem:[#allocation9 + $0x82]]
        %v494 = vstv %s493
        %v495 = vmul.f32 %v307, %v494
        %v496 = vmul.f32 %v308, %v494
        %v497 = vadd.f32 %v491, %v495
        %v498 = vadd.f32 %v492, %v496
        %s499 = sld [smem:[#allocation9 + $0x83]]
        %v500 = vstv %s499
        %v501 = vmul.f32 %v310, %v500
        %v502 = vmul.f32 %v311, %v500
        %v503 = vadd.f32 %v497, %v501
        %v504 = vadd.f32 %v498, %v502
        %s505 = sld [smem:[#allocation9 + $0x84]]
        %v506 = vstv %s505
        %v507 = vmul.f32 %v444, %v506
        %v508 = vmul.f32 %v445, %v506
        %v509 = vadd.f32 %v503, %v507
        %v510 = vadd.f32 %v504, %v508
        %s511 = sld [smem:[#allocation10 + $0x1]]
        %v512 = vstv %s511
        %v513 = vadd.f32 %v509, %v512
        %v514 = vadd.f32 %v510, %v512
        %v515 = vmax.f32 %v513, 0.0
        %v516 = vmax.f32 %v514, 0.0
        %s517 = scalar_lea.vmem %s298, 16 [#allocation11]
        %518 = vst.msk [vmem:[%s517] sm:$0xff] %vm480, %v515
        %519 = vst.msk [vmem:[%s517 + $0x8] sm:$0xff] %vm480, %v516
        %s520 = sld [smem:[#allocation9 + $0x100]]
        %v521 = vstv %s520
        %v522 = vmul.f32 %v301, %v521
        %v523 = vmul.f32 %v302, %v521
        %s524 = sld [smem:[#allocation9 + $0x101]]
        %v525 = vstv %s524
        %v526 = vmul.f32 %v304, %v525
        %v527 = vmul.f32 %v305, %v525
        %v528 = vadd.f32 %v522, %v526
        %v529 = vadd.f32 %v523, %v527
        %s530 = sld [smem:[#allocation9 + $0x102]]
        %v531 = vstv %s530
        %v532 = vmul.f32 %v307, %v531
        %v533 = vmul.f32 %v308, %v531
        %v534 = vadd.f32 %v528, %v532
        %v535 = vadd.f32 %v529, %v533
        %s536 = sld [smem:[#allocation9 + $0x103]]
        %v537 = vstv %s536
        %v538 = vmul.f32 %v310, %v537
        %v539 = vmul.f32 %v311, %v537
        %v540 = vadd.f32 %v534, %v538
        %v541 = vadd.f32 %v535, %v539
        %s542 = sld [smem:[#allocation9 + $0x104]]
        %v543 = vstv %s542
        %v544 = vmul.f32 %v444, %v543
        %v545 = vmul.f32 %v445, %v543
        %v546 = vadd.f32 %v540, %v544
        %v547 = vadd.f32 %v541, %v545
        %s548 = sld [smem:[#allocation10 + $0x2]]
        %v549 = vstv %s548
        %v550 = vadd.f32 %v546, %v549
        %v551 = vadd.f32 %v547, %v549
        %v552 = vmax.f32 %v550, 0.0
        %v553 = vmax.f32 %v551, 0.0
        %s554 = scalar_lea.vmem %s298, 32 [#allocation11]
        %555 = vst.msk [vmem:[%s554] sm:$0xff] %vm480, %v552
        %556 = vst.msk [vmem:[%s554 + $0x8] sm:$0xff] %vm480, %v553
        %s557 = sld [smem:[#allocation9 + $0x180]]
        %v558 = vstv %s557
        %v559 = vmul.f32 %v301, %v558
        %v560 = vmul.f32 %v302, %v558
        %s561 = sld [smem:[#allocation9 + $0x181]]
        %v562 = vstv %s561
        %v563 = vmul.f32 %v304, %v562
        %v564 = vmul.f32 %v305, %v562
        %v565 = vadd.f32 %v559, %v563
        %v566 = vadd.f32 %v560, %v564
        %s567 = sld [smem:[#allocation9 + $0x182]]
        %v568 = vstv %s567
        %v569 = vmul.f32 %v307, %v568
        %v570 = vmul.f32 %v308, %v568
        %v571 = vadd.f32 %v565, %v569
        %v572 = vadd.f32 %v566, %v570
        %s573 = sld [smem:[#allocation9 + $0x183]]
        %v574 = vstv %s573
        %v575 = vmul.f32 %v310, %v574
        %v576 = vmul.f32 %v311, %v574
        %v577 = vadd.f32 %v571, %v575
        %v578 = vadd.f32 %v572, %v576
        %s579 = sld [smem:[#allocation9 + $0x184]]
        %v580 = vstv %s579
        %v581 = vmul.f32 %v444, %v580
        %v582 = vmul.f32 %v445, %v580
        %v583 = vadd.f32 %v577, %v581
        %v584 = vadd.f32 %v578, %v582
        %s585 = sld [smem:[#allocation10 + $0x3]]
        %v586 = vstv %s585
        %v587 = vadd.f32 %v583, %v586
        %v588 = vadd.f32 %v584, %v586
        %v589 = vmax.f32 %v587, 0.0
        %v590 = vmax.f32 %v588, 0.0
        %s591 = scalar_lea.vmem %s298, 48 [#allocation11]
        %592 = vst.msk [vmem:[%s591] sm:$0xff] %vm480, %v589
        %593 = vst.msk [vmem:[%s591 + $0x8] sm:$0xff] %vm480, %v590
        %s594 = sld [smem:[#allocation9 + $0x200]]
        %v595 = vstv %s594
        %v596 = vmul.f32 %v301, %v595
        %v597 = vmul.f32 %v302, %v595
        %s598 = sld [smem:[#allocation9 + $0x201]]
        %v599 = vstv %s598
        %v600 = vmul.f32 %v304, %v599
        %v601 = vmul.f32 %v305, %v599
        %v602 = vadd.f32 %v596, %v600
        %v603 = vadd.f32 %v597, %v601
        %s604 = sld [smem:[#allocation9 + $0x202]]
        %v605 = vstv %s604
        %v606 = vmul.f32 %v307, %v605
        %v607 = vmul.f32 %v308, %v605
        %v608 = vadd.f32 %v602, %v606
        %v609 = vadd.f32 %v603, %v607
        %s610 = sld [smem:[#allocation9 + $0x203]]
        %v611 = vstv %s610
        %v612 = vmul.f32 %v310, %v611
        %v613 = vmul.f32 %v311, %v611
        %v614 = vadd.f32 %v608, %v612
        %v615 = vadd.f32 %v609, %v613
        %s616 = sld [smem:[#allocation9 + $0x204]]
        %v617 = vstv %s616
        %v618 = vmul.f32 %v444, %v617
        %v619 = vmul.f32 %v445, %v617
        %v620 = vadd.f32 %v614, %v618
        %v621 = vadd.f32 %v615, %v619
        %s622 = sld [smem:[#allocation10 + $0x4]]
        %v623 = vstv %s622
        %v624 = vadd.f32 %v620, %v623
        %v625 = vadd.f32 %v621, %v623
        %v626 = vmax.f32 %v624, 0.0
        %v627 = vmax.f32 %v625, 0.0
        %s628 = scalar_lea.vmem %s298, 64 [#allocation11]
        %629 = vst.msk [vmem:[%s628] sm:$0xff] %vm480, %v626
        %630 = vst.msk [vmem:[%s628 + $0x8] sm:$0xff] %vm480, %v627
        %s631 = sld [smem:[#allocation9 + $0x280]]
        %v632 = vstv %s631
        %v633 = vmul.f32 %v301, %v632
        %v634 = vmul.f32 %v302, %v632
        %s635 = sld [smem:[#allocation9 + $0x281]]
        %v636 = vstv %s635
        %v637 = vmul.f32 %v304, %v636
        %v638 = vmul.f32 %v305, %v636
        %v639 = vadd.f32 %v633, %v637
        %v640 = vadd.f32 %v634, %v638
        %s641 = sld [smem:[#allocation9 + $0x282]]
        %v642 = vstv %s641
        %v643 = vmul.f32 %v307, %v642
        %v644 = vmul.f32 %v308, %v642
        %v645 = vadd.f32 %v639, %v643
        %v646 = vadd.f32 %v640, %v644
        %s647 = sld [smem:[#allocation9 + $0x283]]
        %v648 = vstv %s647
        %v649 = vmul.f32 %v310, %v648
        %v650 = vmul.f32 %v311, %v648
        %v651 = vadd.f32 %v645, %v649
        %v652 = vadd.f32 %v646, %v650
        %s653 = sld [smem:[#allocation9 + $0x284]]
        %v654 = vstv %s653
        %v655 = vmul.f32 %v444, %v654
        %v656 = vmul.f32 %v445, %v654
        %v657 = vadd.f32 %v651, %v655
        %v658 = vadd.f32 %v652, %v656
        %s659 = sld [smem:[#allocation10 + $0x5]]
        %v660 = vstv %s659
        %v661 = vadd.f32 %v657, %v660
        %v662 = vadd.f32 %v658, %v660
        %v663 = vmax.f32 %v661, 0.0
        %v664 = vmax.f32 %v662, 0.0
        %s665 = scalar_lea.vmem %s298, 80 [#allocation11]
        %666 = vst.msk [vmem:[%s665] sm:$0xff] %vm480, %v663
        %667 = vst.msk [vmem:[%s665 + $0x8] sm:$0xff] %vm480, %v664
        %s668 = sld [smem:[#allocation9 + $0x300]]
        %v669 = vstv %s668
        %v670 = vmul.f32 %v301, %v669
        %v671 = vmul.f32 %v302, %v669
        %s672 = sld [smem:[#allocation9 + $0x301]]
        %v673 = vstv %s672
        %v674 = vmul.f32 %v304, %v673
        %v675 = vmul.f32 %v305, %v673
        %v676 = vadd.f32 %v670, %v674
        %v677 = vadd.f32 %v671, %v675
        %s678 = sld [smem:[#allocation9 + $0x302]]
        %v679 = vstv %s678
        %v680 = vmul.f32 %v307, %v679
        %v681 = vmul.f32 %v308, %v679
        %v682 = vadd.f32 %v676, %v680
        %v683 = vadd.f32 %v677, %v681
        %s684 = sld [smem:[#allocation9 + $0x303]]
        %v685 = vstv %s684
        %v686 = vmul.f32 %v310, %v685
        %v687 = vmul.f32 %v311, %v685
        %v688 = vadd.f32 %v682, %v686
        %v689 = vadd.f32 %v683, %v687
        %s690 = sld [smem:[#allocation9 + $0x304]]
        %v691 = vstv %s690
        %v692 = vmul.f32 %v444, %v691
        %v693 = vmul.f32 %v445, %v691
        %v694 = vadd.f32 %v688, %v692
        %v695 = vadd.f32 %v689, %v693
        %s696 = sld [smem:[#allocation10 + $0x6]]
        %v697 = vstv %s696
        %v698 = vadd.f32 %v694, %v697
        %v699 = vadd.f32 %v695, %v697
        %v700 = vmax.f32 %v698, 0.0
        %v701 = vmax.f32 %v699, 0.0
        %s702 = scalar_lea.vmem %s298, 96 [#allocation11]
        %703 = vst.msk [vmem:[%s702] sm:$0xff] %vm480, %v700
        %704 = vst.msk [vmem:[%s702 + $0x8] sm:$0xff] %vm480, %v701
        %s705 = sld [smem:[#allocation9 + $0x380]]
        %v706 = vstv %s705
        %v707 = vmul.f32 %v301, %v706
        %v708 = vmul.f32 %v302, %v706
        %s709 = sld [smem:[#allocation9 + $0x381]]
        %v710 = vstv %s709
        %v711 = vmul.f32 %v304, %v710
        %v712 = vmul.f32 %v305, %v710
        %v713 = vadd.f32 %v707, %v711
        %v714 = vadd.f32 %v708, %v712
        %s715 = sld [smem:[#allocation9 + $0x382]]
        %v716 = vstv %s715
        %v717 = vmul.f32 %v307, %v716
        %v718 = vmul.f32 %v308, %v716
        %v719 = vadd.f32 %v713, %v717
        %v720 = vadd.f32 %v714, %v718
        %s721 = sld [smem:[#allocation9 + $0x383]]
        %v722 = vstv %s721
        %v723 = vmul.f32 %v310, %v722
        %v724 = vmul.f32 %v311, %v722
        %v725 = vadd.f32 %v719, %v723
        %v726 = vadd.f32 %v720, %v724
        %s727 = sld [smem:[#allocation9 + $0x384]]
        %v728 = vstv %s727
        %v729 = vmul.f32 %v444, %v728
        %v730 = vmul.f32 %v445, %v728
        %v731 = vadd.f32 %v725, %v729
        %v732 = vadd.f32 %v726, %v730
        %s733 = sld [smem:[#allocation10 + $0x7]]
        %v734 = vstv %s733
        %v735 = vadd.f32 %v731, %v734
        %v736 = vadd.f32 %v732, %v734
        %v737 = vmax.f32 %v735, 0.0
        %v738 = vmax.f32 %v736, 0.0
        %s739 = scalar_lea.vmem %s298, 112 [#allocation11]
        %740 = vst.msk [vmem:[%s739] sm:$0xff] %vm480, %v737
        %741 = vst.msk [vmem:[%s739 + $0x8] sm:$0xff] %vm480, %v738
        %s742 = sand.u32 %s146, 1
        %s743 = scalar_lea.sflag [#allocation4], %s742
        %s744 = sand.u32 %s146, 1
        %s745 = smul.addr %s744, 128
        %s746 = scalar_lea.vmem [#allocation11], %s745
        // Predicated region
        $region53: #{tpu_custom_call.1} parent=35 // pred_check
          %p747 = pneg %p156
        $region54: #{tpu_custom_call.1} parent=35 // pred_check_branch
          %749 = sbr.rel (%p747) target = $region56
        $region55: #{tpu_custom_call.1} parent=35 // pred_region
          %s750 = smul.u32 2, %s31
          %s752 = ssub.s32 2048, 2048
          %753 = vsyncadd %s743, %s752
          %s754 = smul.addr %s30, 16
          %s755 = sadd.s32 %s750, %s754
          %s756 = smul.addr %s755, 128
          %s757 = scalar_lea.hbm %s4, %s756
          %s758 = sshll.u32 %s746, 4
          %s759 = int_to_ptr.vmem [resolvable:$true] %s758
          %764 = dma.vmem_to_hbm [thread:$0]  %s759, 2048, %s757, %s743, 128, 128, 8
        $region56: #{tpu_custom_call.1} parent=35 // pred_fallthru
          _
      $region36: #{tpu_custom_call.1} parent=5 // pred_fallthru
        _
      %p765 = scmp.le.s32.totalorder 2, %s21
      // Predicated region
      $region57: #{tpu_custom_call.1} parent=5 // pred_check
        %p766 = pneg %p765
      $region58: #{tpu_custom_call.1} parent=5 // pred_check_branch
        %768 = sbr.rel (%p766) target = $region60
      $region59: #{tpu_custom_call.1} parent=5 // pred_region
        %s769 = ssub.s32 %s21, 2
        // Predicated region
        $region61: #{tpu_custom_call.1} parent=59 // pred_check
          %p770 = pneg %p162
        $region62: #{tpu_custom_call.1} parent=59 // pred_check_branch
          %772 = sbr.rel (%p770) target = $region64
        $region63: #{tpu_custom_call.1} parent=59 // pred_region
          %s773 = sand.u32 %s147, 1
          %s774 = scalar_lea.sflag [#allocation4], %s773
          %s775 = sand.u32 %s147, 1
          %s776 = smul.addr %s775, 128
          %s777 = scalar_lea.vmem [#allocation11], %s776
          %778 = dma.done %s774, 2048
        $region64: #{tpu_custom_call.1} parent=59 // pred_fallthru
          _
      $region60: #{tpu_custom_call.1} parent=5 // pred_fallthru
        _
    $region6: #{tpu_custom_call.1} parent=1 // loop_footer
      %s25 = sadd.s32 1, %s21
    $region7: #{tpu_custom_call.1} parent=1 // loop_footer_branch
      %20 = sbr.rel target = $region3
    $region8: #{tpu_custom_call.1} parent=1 // loop_exit
      _
    %779 = vsyncpa [#allocation3], 1
    %s780 = scalar_lea.sflag [#allocation3], 1
    %781 = vsyncpa %s780, 1
    %782 = vsyncpa [#allocation8], 1
    %s783 = scalar_lea.sflag [#allocation8], 1
    %784 = vsyncpa %s783, 1
    %785 = vsyncpa [#allocation4], 1
    %s786 = scalar_lea.sflag [#allocation4], 1
    %787 = vsyncpa %s786, 1
    %788 = vsyncpa [#allocation5], 1
    %s789 = scalar_lea.sflag [#allocation5], 1
    %790 = vsyncpa %s789, 1
    %791 = vsyncpa [#allocation6], 1
    %s792 = scalar_lea.sflag [#allocation6], 1
    %793 = vsyncpa %s792, 1

</llo_original>
